<compile_context>
chip_gen: v5e
topology: v5e:2x2
jax: 0.10.0
libtpu: 0.0.40
codegen_flags: <defaults>
</compile_context>

<pallas_src>
import functools
import warnings

import numpy as np
import jax
import jax.numpy as jnp
from jax.experimental import pallas as pl
from jax.experimental.pallas import tpu as pltpu

# Buffer-donation "not usable" warnings are harmless (XLA falls back to a
# copy); keep stdout/stderr clean.
warnings.filterwarnings("ignore", message=".*donat.*")

# Safe scoped-VMEM budget on every generation (v5e default 16 MiB, v6e 32 MiB,
# v7x 32 MiB default / 64 MiB physical).  The tiles below stay far smaller.
_VMEM_LIMIT_BYTES = 32 * 1024 * 1024


def _vmem_capacity_bytes():
    """Per-chip VMEM capacity (gen-aware); conservative fallback = v7x 64 MiB."""
    try:
        return int(pltpu.get_tpu_info().vmem_capacity_bytes)
    except Exception:
        return 64 * 1024 * 1024


# ---------------------------------------------------------------------------
# Kernel 1: coalesced ring-buffer write (embeddings + labels in ONE call)
#   memory[start_s : start_s + len_s, :] = embeddings[off_s : off_s + len_s, :]
# for at most two contiguous segments (wraparound).  All operands live in
# HBM (memory_space=pl.ANY); the kernel issues one DMA per (segment, array).
# ---------------------------------------------------------------------------
@functools.lru_cache(maxsize=None)
def _build_ring_writer(mem_size, dim, batch, seg_lens):
    """seg_lens: static tuple of contiguous segment lengths (sum == batch)."""
    n_segs = len(seg_lens)

    def kernel(starts_ref, emb_ref, lab_ref, mem_in, labmem_in,
               mem_out, labmem_out, sems):
        # mem_in / labmem_in are the aliased old buffers; never read --
        # aliasing is what preserves the rows this call does not touch.
        del mem_in, labmem_in
        copies = []
        off = 0
        for s in range(n_segs):
            seg_len = seg_lens[s]              # static Python int
            start = starts_ref[s]              # dynamic (SMEM scalar prefetch)
            cp_e = pltpu.make_async_copy(
                emb_ref.at[pl.ds(off, seg_len), :],
                mem_out.at[pl.ds(start, seg_len), :],
                sems.at[2 * s])
            cp_l = pltpu.make_async_copy(
                lab_ref.at[pl.ds(off, seg_len), :],
                labmem_out.at[pl.ds(start, seg_len), :],
                sems.at[2 * s + 1])
            cp_e.start()
            cp_l.start()
            copies.extend((cp_e, cp_l))
            off += seg_len
        for cp in copies:
            cp.wait()

    call = pl.pallas_call(
        kernel,
        out_shape=(jax.ShapeDtypeStruct((mem_size, dim), jnp.float32),
                   jax.ShapeDtypeStruct((mem_size, 1), jnp.int32)),
        grid_spec=pltpu.PrefetchScalarGridSpec(
            num_scalar_prefetch=1,              # segment start rows in SMEM
            grid=(1,),
            in_specs=[pl.BlockSpec(memory_space=pl.ANY),   # new embeddings
                      pl.BlockSpec(memory_space=pl.ANY),   # new labels (B,1)
                      pl.BlockSpec(memory_space=pl.ANY),   # old memory (aliased)
                      pl.BlockSpec(memory_space=pl.ANY)],  # old label mem (aliased)
            out_specs=(pl.BlockSpec(memory_space=pl.ANY),
                       pl.BlockSpec(memory_space=pl.ANY)),
            scratch_shapes=[pltpu.SemaphoreType.DMA((2 * n_segs,))],
        ),
        # Flat inputs are (starts, emb, labels, memory, label_memory); alias
        # the two old memories onto the two outputs so untouched rows persist.
        input_output_aliases={3: 0, 4: 1},
        compiler_params=pltpu.CompilerParams(
            dimension_semantics=("arbitrary",),
            vmem_limit_bytes=_VMEM_LIMIT_BYTES,
        ),
    )

    def run(memory, labmem2, emb, lab2, starts):
        return call(starts, emb, lab2, memory, labmem2)

    # Donate the big embedding memory so the aliased update is truly in place.
    return jax.jit(run, donate_argnums=(0,))


def ring_buffer_write(memory, label_memory, embeddings, labels, queue_idx):
    """Circular-buffer update of (embedding memory, label memory).

    memory:       (memory_size, dim) float32  -- DONATED (do not reuse input)
    label_memory: (memory_size,)     int32
    embeddings:   (batch, dim)
    labels:       (batch,)
    queue_idx:    Python int, start row of the write (wraps around the end)
    """
    mem_size, dim = memory.shape
    batch = embeddings.shape[0]
    end = queue_idx + batch
    if end <= mem_size:
        seg_lens = (batch,)
        starts = [queue_idx]
    else:                                   # wraparound: tail + head segments
        first = mem_size - queue_idx
        seg_lens = (first, batch - first)
        starts = [queue_idx, 0]

    starts_arr = jnp.asarray(np.asarray(starts, np.int32))
    emb = embeddings if embeddings.dtype == jnp.float32 else embeddings.astype(jnp.float32)
    lab2 = labels.astype(jnp.int32).reshape(batch, 1)
    labmem2 = label_memory.astype(jnp.int32).reshape(mem_size, 1)

    run = _build_ring_writer(int(mem_size), int(dim), int(batch), seg_lens)
    new_mem, new_labmem = run(memory, labmem2, emb, lab2, starts_arr)
    return new_mem, new_labmem.reshape(mem_size)


# ---------------------------------------------------------------------------
# Kernel 2: label match mask  matches = (labels[:,None] == ref_labels[None,:])
#   Single int8 output (diffs derived host-side), fat lane-dense tiles.
# ---------------------------------------------------------------------------
def _match_mask_kernel(lab_ref, ref_ref, out_ref):
    out_ref[...] = (lab_ref[...] == ref_ref[...]).astype(out_ref.dtype)


def _choose_mask_tile(mem, batch):
    if mem <= 256:
        return mem                                  # single full-extent block
    # Double-buffered int32 ref-label block + int8 output block, bytes / lane.
    budget = min(_vmem_capacity_bytes() // 4, 16 * 1024 * 1024)
    per_lane = 2 * (4 + batch)
    cap_tile = max(128, (budget // per_lane) // 128 * 128)
    # Keep >= 2 grid steps so v7x's two TensorCores both get work.
    half = ((-(-mem // 2)) + 127) // 128 * 128
    return max(128, min(cap_tile, half, 32768))


@functools.lru_cache(maxsize=None)
def _build_pair_mask(batch, mem, tile):
    call = pl.pallas_call(
        _match_mask_kernel,
        out_shape=jax.ShapeDtypeStruct((batch, mem), jnp.int8),
        grid=(pl.cdiv(mem, tile),),
        in_specs=[
            pl.BlockSpec((batch, 1), lambda j: (0, 0)),
            pl.BlockSpec((1, tile), lambda j: (0, j)),
        ],
        out_specs=pl.BlockSpec((batch, tile), lambda j: (0, j)),
        compiler_params=pltpu.CompilerParams(
            dimension_semantics=("parallel",),       # independent tiles
            vmem_limit_bytes=_VMEM_LIMIT_BYTES,
        ),
    )
    return jax.jit(call)


def pair_match_mask(labels, ref_labels):
    """int8 (batch, memory) mask: labels[i] == ref_labels[j]."""
    batch = int(labels.shape[0])
    mem = int(ref_labels.shape[0])
    tile = _choose_mask_tile(mem, batch)
    lab2 = labels.astype(jnp.int32).reshape(batch, 1)
    ref2 = ref_labels.astype(jnp.int32).reshape(1, mem)
    return _build_pair_mask(batch, mem, tile)(lab2, ref2)


# ---------------------------------------------------------------------------
# pml helpers (lmu.get_all_pairs_indices / c_f.shift_indices_tuple)
# ---------------------------------------------------------------------------
def get_all_pairs_indices(labels, ref_labels, valid_len=None):
    # torch.where has dynamic output shape -> indices extracted host-side on
    # the Pallas-computed mask (diffs = logical-not of matches, no 2nd output).
    m = np.asarray(jax.device_get(pair_match_mask(labels, ref_labels)))
    if valid_len is not None:
        m = m[:, :valid_len]
    a1, p = np.nonzero(m)
    a2, n = np.nonzero(m == 0)
    as_i32 = lambda x: jnp.asarray(x, dtype=jnp.int32)
    return as_i32(a1), as_i32(p), as_i32(a2), as_i32(n)


def shift_indices_tuple(indices_tuple, batch_size):
    if len(indices_tuple) == 3:
        return (indices_tuple[0],) + tuple(x + batch_size for x in indices_tuple[1:])
    return tuple(x + batch_size if i % 2 == 1 else x
                 for i, x in enumerate(indices_tuple))


# ---------------------------------------------------------------------------
# CrossBatchMemory (JAX / Pallas port)
# ---------------------------------------------------------------------------
class CrossBatchMemory:
    def __init__(self, loss, embedding_size, memory_size=1024, miner=None):
        self.loss = loss
        self.miner = miner
        self.memory_size = memory_size
        self.embedding_memory = jnp.zeros((memory_size, embedding_size), jnp.float32)
        # torch uses int64 labels; int32 is the natural TPU integer width
        # (silent narrowing only matters for labels >= 2**31).
        self.label_memory = jnp.zeros((memory_size,), jnp.int32)
        self.has_been_filled = False
        self.queue_idx = 0

    def __call__(self, embeddings, labels, input_indices_tuple=None):
        return self.forward(embeddings, labels, input_indices_tuple)

    def forward(self, embeddings, labels, input_indices_tuple=None):
        assert embeddings.shape[0] <= self.embedding_memory.shape[0]
        batch_size = embeddings.shape[0]
        self.add_to_memory(embeddings, labels, batch_size)
        if not self.has_been_filled:
            # Matches the original module's dynamic-shape slicing semantics;
            # the Pallas mask kernel itself always sees the full static shape.
            E_mem = self.embedding_memory[:self.queue_idx]
            L_mem = self.label_memory[:self.queue_idx]
        else:
            E_mem = self.embedding_memory
            L_mem = self.label_memory
        indices_tuple = self.create_indices_tuple(
            batch_size, embeddings, labels, E_mem, L_mem, input_indices_tuple)
        combined_embeddings = jnp.concatenate(
            [embeddings.astype(self.embedding_memory.dtype), E_mem], axis=0)
        combined_labels = jnp.concatenate(
            [labels.astype(L_mem.dtype), L_mem], axis=0)
        return self.loss(combined_embeddings, combined_labels, indices_tuple)

    def add_to_memory(self, embeddings, labels, batch_size):
        # queue_idx / batch_size are Python ints -> the 1-2 contiguous segment
        # lengths are static; starts go to the kernel via scalar prefetch.
        self.embedding_memory, self.label_memory = ring_buffer_write(
            self.embedding_memory, self.label_memory,
            jax.lax.stop_gradient(embeddings),
            jax.lax.stop_gradient(labels),
            self.queue_idx)
        prev_queue_idx = self.queue_idx
        self.queue_idx = (self.queue_idx + batch_size) % self.memory_size
        if not self.has_been_filled and self.queue_idx <= prev_queue_idx:
            self.has_been_filled = True

    def create_indices_tuple(self, batch_size, embeddings, labels, E_mem, L_mem,
                             input_indices_tuple):
        if self.miner:
            indices_tuple = self.miner(embeddings, labels, E_mem, L_mem)
        else:
            # Mask kernel runs on the full label memory (one compile for every
            # fill state); the valid prefix is sliced host-side.
            valid_len = None if self.has_been_filled else self.queue_idx
            indices_tuple = get_all_pairs_indices(
                labels, self.label_memory, valid_len=valid_len)
        indices_tuple = shift_indices_tuple(indices_tuple, batch_size)
        if input_indices_tuple is not None:
            if len(input_indices_tuple) != len(indices_tuple):
                # TODO(synk): lmu.convert_to_pairs / convert_to_triplets (arity
                # conversion of user-provided indices) is not implemented.
                raise NotImplementedError("pairs<->triplets conversion not ported")
            indices_tuple = tuple(
                jnp.concatenate([jnp.asarray(x), jnp.asarray(y)], axis=0)
                for x, y in zip(indices_tuple, input_indices_tuple))
        return indices_tuple


# ---------------------------------------------------------------------------
# Demo loss (stands in for the externally supplied `loss` module)
# ---------------------------------------------------------------------------
def simple_contrastive_loss(embeddings, labels, indices_tuple, margin=1.0):
    del labels
    a1, p, a2, n = indices_tuple

    def dist(i, j):
        d = embeddings[i] - embeddings[j]
        return jnp.sqrt(jnp.sum(d * d, axis=-1) + 1e-12)

    pos = dist(a1, p) if int(a1.shape[0]) > 0 else jnp.zeros((0,), jnp.float32)
    neg = dist(a2, n) if int(a2.shape[0]) > 0 else jnp.zeros((0,), jnp.float32)
    pos_term = jnp.mean(pos) if int(pos.shape[0]) > 0 else jnp.float32(0.0)
    neg_term = (jnp.mean(jnp.maximum(margin - neg, 0.0))
                if int(neg.shape[0]) > 0 else jnp.float32(0.0))
    return pos_term + neg_term


if __name__ == "__main__":
    key = jax.random.PRNGKey(0)
    k1, k2, k3, k4, k5, k6 = jax.random.split(key, 6)

    batch, emb_dim, mem_size = 8, 128, 256
    emb1 = jax.random.normal(k1, (batch, emb_dim), dtype=jnp.float32)
    lab1 = jax.random.randint(k2, (batch,), 0, 4, dtype=jnp.int32)
    emb2 = jax.random.normal(k3, (batch, emb_dim), dtype=jnp.float32)
    lab2 = jax.random.randint(k4, (batch,), 0, 4, dtype=jnp.int32)

    xbm = CrossBatchMemory(loss=simple_contrastive_loss,
                           embedding_size=emb_dim, memory_size=mem_size)

    loss1 = jax.block_until_ready(xbm(emb1, lab1))
    loss2 = jax.block_until_ready(xbm(emb2, lab2))

    # ---- ring-buffer memory state after two steps ----
    mem_ref = np.zeros((mem_size, emb_dim), np.float32)
    mem_ref[0:batch] = np.asarray(emb1)
    mem_ref[batch:2 * batch] = np.asarray(emb2)
    assert np.allclose(np.asarray(xbm.embedding_memory), mem_ref, atol=1e-6)
    lab_ref_np = np.zeros((mem_size,), np.int32)
    lab_ref_np[0:batch] = np.asarray(lab1)
    lab_ref_np[batch:2 * batch] = np.asarray(lab2)
    assert np.array_equal(np.asarray(xbm.label_memory), lab_ref_np)
    assert xbm.queue_idx == 2 * batch and not xbm.has_been_filled

    # ---- match-mask kernel vs numpy (full memory, single tile) ----
    m = np.asarray(jax.device_get(pair_match_mask(lab2, xbm.label_memory)))
    m_np = (np.asarray(lab2)[:, None] == lab_ref_np[None, :]).astype(np.int8)
    assert np.array_equal(m, m_np)

    # ---- match-mask kernel: multi-tile (1024 -> 2 tiles) and
    #      non-multiple-of-128 memory (333 -> partial trailing block) ----
    for big_mem in (1024, 333):
        klabs = jax.random.randint(k5, (big_mem,), 0, 4, dtype=jnp.int32)
        mbig = np.asarray(jax.device_get(pair_match_mask(lab2, klabs)))
        mbig_np = (np.asarray(lab2)[:, None] ==
                   np.asarray(klabs)[None, :]).astype(np.int8)
        assert np.array_equal(mbig, mbig_np)

    # ---- get_all_pairs_indices (valid prefix slicing) vs numpy ----
    a1, p, a2, n = get_all_pairs_indices(lab2, xbm.label_memory,
                                         valid_len=xbm.queue_idx)
    mm = np.asarray(lab2)[:, None] == lab_ref_np[None, :2 * batch]
    ra1, rp = np.nonzero(mm)
    ra2, rn = np.nonzero(~mm)
    assert np.array_equal(np.asarray(a1), ra1) and np.array_equal(np.asarray(p), rp)
    assert np.array_equal(np.asarray(a2), ra2) and np.array_equal(np.asarray(n), rn)

    # ---- coalesced ring write with wraparound (two DMA segments) ----
    small_mem, wbatch = 32, 12
    base = jnp.arange(small_mem * emb_dim, dtype=jnp.float32).reshape(small_mem, emb_dim)
    base_lab = jnp.arange(small_mem, dtype=jnp.int32)
    base_np = np.asarray(base).copy()          # snapshot BEFORE donation
    base_lab_np = np.asarray(base_lab).copy()
    newr = -jnp.ones((wbatch, emb_dim), dtype=jnp.float32)
    newl = jnp.full((wbatch,), 7, dtype=jnp.int32)
    q0 = 26                                    # rows 26..31 then 0..5
    new_mem, new_labmem = ring_buffer_write(base, base_lab, newr, newl, q0)
    new_mem, new_labmem = jax.block_until_ready((new_mem, new_labmem))
    ref_mem = base_np.copy()
    ref_lab = base_lab_np.copy()
    idx = (q0 + np.arange(wbatch)) % small_mem
    ref_mem[idx] = np.asarray(newr)
    ref_lab[idx] = np.asarray(newl)
    assert np.allclose(np.asarray(new_mem), ref_mem)
    assert np.array_equal(np.asarray(new_labmem), ref_lab)

    # ---- fill a tiny memory to exercise has_been_filled + full-mask path ----
    xbm2 = CrossBatchMemory(loss=simple_contrastive_loss,
                            embedding_size=32, memory_size=16)
    for i in range(3):
        e = jax.random.normal(jax.random.fold_in(k6, i), (8, 32), jnp.float32)
        l = jax.random.randint(jax.random.fold_in(k6, 100 + i), (8,), 0, 3, jnp.int32)
        jax.block_until_ready(xbm2(e, l))
    assert xbm2.has_been_filled and xbm2.queue_idx == 8

    assert np.isfinite(float(loss1)) and np.isfinite(float(loss2))
    print("KERNEL_OK")
</pallas_src>

<mosaic_0001>
module attributes {stable_mosaic.version = 11 : i64} {
  func.func @kernel(%arg0: i32, %arg1: memref<1xi32, #tpu.memory_space<smem>>, %arg2: memref<8x128xf32, #tpu.memory_space<any>>, %arg3: memref<8x1xi32, #tpu.memory_space<any>>, %arg4: memref<256x128xf32, #tpu.memory_space<any>>, %arg5: memref<256x1xi32, #tpu.memory_space<any>>, %arg6: memref<256x128xf32, #tpu.memory_space<any>>, %arg7: memref<256x1xi32, #tpu.memory_space<any>>, %arg8: memref<2x!tpu.dma_semaphore, #tpu.memory_space<semaphore_mem>>) attributes {dimension_semantics = [#tpu.dimension_semantics<arbitrary>], iteration_bounds = array<i64: 1>, scalar_prefetch = 1 : i64, scratch_operands = 1 : i64, tpu.core_type = #tpu.core_type<tc>, window_params = [{}, {}, {}, {}, {}, {}]} {
    %c0 = arith.constant 0 : index
    %0 = memref.load %arg1[%c0] : memref<1xi32, #tpu.memory_space<smem>>
    %c0_i32 = arith.constant 0 : i32
    %c0_i32_0 = arith.constant 0 : i32
    %c0_i32_1 = arith.constant 0 : i32
    %1 = tpu.memref_slice %arg2[%c0_i32_0, %c0_i32_1] : memref<8x128xf32, #tpu.memory_space<any>> -> memref<8x128xf32, #tpu.memory_space<any>>
    %c0_i32_2 = arith.constant 0 : i32
    %2 = tpu.memref_slice %arg6[%0, %c0_i32_2] : memref<256x128xf32, #tpu.memory_space<any>> -> memref<8x128xf32, #tpu.memory_space<any>>
    %3 = tpu.memref_slice %arg8[%c0_i32] : memref<2x!tpu.dma_semaphore, #tpu.memory_space<semaphore_mem>> -> memref<1x!tpu.dma_semaphore, #tpu.memory_space<semaphore_mem>>
    %4 = tpu.memref_squeeze %3 : memref<1x!tpu.dma_semaphore, #tpu.memory_space<semaphore_mem>> -> memref<!tpu.dma_semaphore, #tpu.memory_space<semaphore_mem>>
    tpu.enqueue_dma source(%1 : memref<8x128xf32, #tpu.memory_space<any>>) target(%2 : memref<8x128xf32, #tpu.memory_space<any>>) target_semaphore(%4 : memref<!tpu.dma_semaphore, #tpu.memory_space<semaphore_mem>>)
    %c1_i32 = arith.constant 1 : i32
    %c0_i32_3 = arith.constant 0 : i32
    %c0_i32_4 = arith.constant 0 : i32
    %5 = tpu.memref_slice %arg3[%c0_i32_3, %c0_i32_4] : memref<8x1xi32, #tpu.memory_space<any>> -> memref<8x1xi32, #tpu.memory_space<any>>
    %c0_i32_5 = arith.constant 0 : i32
    %6 = tpu.memref_slice %arg7[%0, %c0_i32_5] : memref<256x1xi32, #tpu.memory_space<any>> -> memref<8x1xi32, #tpu.memory_space<any>>
    %7 = tpu.memref_slice %arg8[%c1_i32] : memref<2x!tpu.dma_semaphore, #tpu.memory_space<semaphore_mem>> -> memref<1x!tpu.dma_semaphore, #tpu.memory_space<semaphore_mem>>
    %8 = tpu.memref_squeeze %7 : memref<1x!tpu.dma_semaphore, #tpu.memory_space<semaphore_mem>> -> memref<!tpu.dma_semaphore, #tpu.memory_space<semaphore_mem>>
    tpu.enqueue_dma source(%5 : memref<8x1xi32, #tpu.memory_space<any>>) target(%6 : memref<8x1xi32, #tpu.memory_space<any>>) target_semaphore(%8 : memref<!tpu.dma_semaphore, #tpu.memory_space<semaphore_mem>>)
    %c0_i32_6 = arith.constant 0 : i32
    %c0_i32_7 = arith.constant 0 : i32
    %c0_i32_8 = arith.constant 0 : i32
    %9 = tpu.memref_slice %arg2[%c0_i32_7, %c0_i32_8] : memref<8x128xf32, #tpu.memory_space<any>> -> memref<8x128xf32, #tpu.memory_space<any>>
    %c0_i32_9 = arith.constant 0 : i32
    %10 = tpu.memref_slice %arg6[%0, %c0_i32_9] : memref<256x128xf32, #tpu.memory_space<any>> -> memref<8x128xf32, #tpu.memory_space<any>>
    %11 = tpu.memref_slice %arg8[%c0_i32_6] : memref<2x!tpu.dma_semaphore, #tpu.memory_space<semaphore_mem>> -> memref<1x!tpu.dma_semaphore, #tpu.memory_space<semaphore_mem>>
    %12 = tpu.memref_squeeze %11 : memref<1x!tpu.dma_semaphore, #tpu.memory_space<semaphore_mem>> -> memref<!tpu.dma_semaphore, #tpu.memory_space<semaphore_mem>>
    tpu.wait_dma2 semaphore(%12 : memref<!tpu.dma_semaphore, #tpu.memory_space<semaphore_mem>>) src(%9 : memref<8x128xf32, #tpu.memory_space<any>>) dst(%10 : memref<8x128xf32, #tpu.memory_space<any>>)
    %c1_i32_10 = arith.constant 1 : i32
    %c0_i32_11 = arith.constant 0 : i32
    %c0_i32_12 = arith.constant 0 : i32
    %13 = tpu.memref_slice %arg3[%c0_i32_11, %c0_i32_12] : memref<8x1xi32, #tpu.memory_space<any>> -> memref<8x1xi32, #tpu.memory_space<any>>
    %c0_i32_13 = arith.constant 0 : i32
    %14 = tpu.memref_slice %arg7[%0, %c0_i32_13] : memref<256x1xi32, #tpu.memory_space<any>> -> memref<8x1xi32, #tpu.memory_space<any>>
    %15 = tpu.memref_slice %arg8[%c1_i32_10] : memref<2x!tpu.dma_semaphore, #tpu.memory_space<semaphore_mem>> -> memref<1x!tpu.dma_semaphore, #tpu.memory_space<semaphore_mem>>
    %16 = tpu.memref_squeeze %15 : memref<1x!tpu.dma_semaphore, #tpu.memory_space<semaphore_mem>> -> memref<!tpu.dma_semaphore, #tpu.memory_space<semaphore_mem>>
    tpu.wait_dma2 semaphore(%16 : memref<!tpu.dma_semaphore, #tpu.memory_space<semaphore_mem>>) src(%13 : memref<8x1xi32, #tpu.memory_space<any>>) dst(%14 : memref<8x1xi32, #tpu.memory_space<any>>)
    return
  }
}

</mosaic_0001>

<llo_original>
// kernel: run.1
$region0: #{run.1}
  #allocation0 [shape = 'u32[]', space=smem, size = 0x4, offset = 0x4, fixed_abs, tag = 'smem constant byte address 0x4 - core index']
  #allocation1 [shape = 'u32[72,128]{1,0:T(1,128)}', space=vmem, size = 0x9000, scoped, tag = 'internal scratch']
  #allocation2 [shape = 's32[2]{0}', space=sflag, size = 0x8, scoped, tag = 'scratch operand']
  #allocation3 [shape = 's32[1]{0}', space=sflag, size = 0x4, scoped, tag = 'scoped memory for run.1']
  #allocation4 [shape = 's32[1]{0:T(128)S(6)}', space=smem, size = 0x200, scoped, tag = 'prefetched SMEM operand 0']
  #allocation5 [shape = 's32[]', space=sflag, size = 0x4, offset = 0, fixed_abs, tag = 'sflag constant byte address 0x0 - dummy sync flag']
  #allocation6 [shape = 's32[]', space=sflag, size = 0x4, offset = 0, fixed_abs, tag = 'sflag constant byte address 0x0 - dummy sync flag']
  %s0 = inlined_call_operand.<no memory space> [shape: s32[1], index: 0, kind: input, shape index: {}]
  %s1 = inlined_call_operand.vmem [shape: f32[8,128], index: 1, kind: input, shape index: {}]
  %s2 = inlined_call_operand.vmem [shape: s32[8,1], index: 2, kind: input, shape index: {}]
  %s3 = inlined_call_operand.vmem [shape: f32[256,128], index: 3, kind: input, shape index: {}, may-alias: {3,5}]
  %s4 = inlined_call_operand.vmem [shape: s32[256,1], index: 4, kind: input, shape index: {}, may-alias: {4,6}]
  %s5 = inlined_call_operand.vmem [shape: f32[256,128], index: 5, kind: output, shape index: {0}, may-alias: {3,5}]
  %s6 = inlined_call_operand.vmem [shape: s32[256,1], index: 6, kind: output, shape index: {1}, may-alias: {4,6}]
  %7 = xla_tuple %s5, %s6
  %s8 = sld [smem:[#allocation0]]
  $region70: #{run.1} parent=0
    _
  %s10 = ssub.s32 1, %s8
  %s11 = scalar_select 0, %s10, %s8
  %12 = sst [smem:[#allocation4]] %s0
  %s13 = sld [smem:[#allocation4]]
  %s14 = scalar_lea.vmem %s5, %s13
  // Predicated region
  $region2: #{run.1} parent=0 // pred_check
    _
  $region3: #{run.1} parent=0 // pred_check_branch
    %16 = sbr.rel (0) target = $region5
  $region4: #{run.1} parent=0 // pred_region
    // Predicated region
    $region17: #{run.1} parent=4 // pred_check
      _
    $region18: #{run.1} parent=4 // pred_check_branch
      %32 = sbr.rel (0) target = $region20
    $region19: #{run.1} parent=4 // pred_region
      loop: start=0, step=1, limit=1
      $region21: #{run.1} parent=19 // loop_pre_header
        _
      $region22: #{run.1} parent=19 // loop_header
        %s34 = sphi 0, %s38
        %p35 = scmp.ge.s32.totalorder %s34, 1
        %s39 = sphi %s1, %s1
        %s40 = sphi %s14, %s14
      $region23: #{run.1} parent=19 // loop_header_branch
        %37 = sbr.rel (%p35) target = $region27
      $region24: #{run.1} parent=19 // loop_body
        %v41 = vld [vmem:[%s39] sm:$0xff]
        %42 = vst [vmem:[%s40] sm:$0xff] %v41
      $region25: #{run.1} parent=19 // loop_footer
        %s38 = sadd.s32 1, %s34
      $region26: #{run.1} parent=19 // loop_footer_branch
        %33 = sbr.rel target = $region22
      $region27: #{run.1} parent=19 // loop_exit
        _
    $region20: #{run.1} parent=4 // pred_fallthru
      _
    // Predicated region
    $region28: #{run.1} parent=4 // pred_check
      _
    $region29: #{run.1} parent=4 // pred_check_branch
      %44 = sbr.rel target = $region31
    $region30: #{run.1} parent=4 // pred_region
      _
    $region31: #{run.1} parent=4 // pred_fallthru
      _
  $region5: #{run.1} parent=0 // pred_fallthru
    _
  // Predicated region
  $region6: #{run.1} parent=0 // pred_check
    _
  $region7: #{run.1} parent=0 // pred_check_branch
    %18 = sbr.rel target = $region9
  $region8: #{run.1} parent=0 // pred_region
    %s20 = ssub.s32 256, 1
    loop: start=0, step=1, limit=1
    $region10: #{run.1} parent=8 // loop_pre_header
      _
    $region11: #{run.1} parent=8 // loop_header
      %s22 = sphi 0, %s26
      %p23 = scmp.ge.s32.totalorder %s22, 1
      %s27 = sphi %s1, %s1
      %s28 = sphi %s14, %s14
    $region12: #{run.1} parent=8 // loop_header_branch
      %25 = sbr.rel (%p23) target = $region16
    $region13: #{run.1} parent=8 // loop_body
      %v29 = vld [vmem:[%s27] sm:%s20]
      %30 = vst [vmem:[%s28] sm:%s20] %v29
    $region14: #{run.1} parent=8 // loop_footer
      %s26 = sadd.s32 1, %s22
    $region15: #{run.1} parent=8 // loop_footer_branch
      %21 = sbr.rel target = $region11
    $region16: #{run.1} parent=8 // loop_exit
      _
  $region9: #{run.1} parent=0 // pred_fallthru
    _
  // Predicated region
  $region32: #{run.1} parent=0 // pred_check
    _
  $region33: #{run.1} parent=0 // pred_check_branch
    %47 = sbr.rel (0) target = $region35
  $region34: #{run.1} parent=0 // pred_region
    %48 = vsyncadd [#allocation2], 128
  $region35: #{run.1} parent=0 // pred_fallthru
    _
  %s49 = scalar_lea.vmem %s6, %s13
  %s50 = scalar_lea.sflag [#allocation2], 1
  // Predicated region
  $region36: #{run.1} parent=0 // pred_check
    _
  $region37: #{run.1} parent=0 // pred_check_branch
    %52 = sbr.rel (0) target = $region39
  $region38: #{run.1} parent=0 // pred_region
    // Predicated region
    $region51: #{run.1} parent=38 // pred_check
      _
    $region52: #{run.1} parent=38 // pred_check_branch
      %68 = sbr.rel (0) target = $region54
    $region53: #{run.1} parent=38 // pred_region
      loop: start=0, step=1, limit=1
      $region55: #{run.1} parent=53 // loop_pre_header
        _
      $region56: #{run.1} parent=53 // loop_header
        %s70 = sphi 0, %s74
        %p71 = scmp.ge.s32.totalorder %s70, 1
        %s75 = sphi %s2, %s2
        %s76 = sphi %s49, %s49
      $region57: #{run.1} parent=53 // loop_header_branch
        %73 = sbr.rel (%p71) target = $region61
      $region58: #{run.1} parent=53 // loop_body
        %v77 = vld [vmem:[%s75] sm:$0xff]
        %78 = vst [vmem:[%s76] sm:$0xff] %v77
      $region59: #{run.1} parent=53 // loop_footer
        %s74 = sadd.s32 1, %s70
      $region60: #{run.1} parent=53 // loop_footer_branch
        %69 = sbr.rel target = $region56
      $region61: #{run.1} parent=53 // loop_exit
        _
    $region54: #{run.1} parent=38 // pred_fallthru
      _
    // Predicated region
    $region62: #{run.1} parent=38 // pred_check
      _
    $region63: #{run.1} parent=38 // pred_check_branch
      %80 = sbr.rel target = $region65
    $region64: #{run.1} parent=38 // pred_region
      _
    $region65: #{run.1} parent=38 // pred_fallthru
      _
  $region39: #{run.1} parent=0 // pred_fallthru
    _
  // Predicated region
  $region40: #{run.1} parent=0 // pred_check
    _
  $region41: #{run.1} parent=0 // pred_check_branch
    %54 = sbr.rel target = $region43
  $region42: #{run.1} parent=0 // pred_region
    %s56 = ssub.s32 256, 1
    loop: start=0, step=1, limit=1
    $region44: #{run.1} parent=42 // loop_pre_header
      _
    $region45: #{run.1} parent=42 // loop_header
      %s58 = sphi 0, %s62
      %p59 = scmp.ge.s32.totalorder %s58, 1
      %s63 = sphi %s2, %s2
      %s64 = sphi %s49, %s49
    $region46: #{run.1} parent=42 // loop_header_branch
      %61 = sbr.rel (%p59) target = $region50
    $region47: #{run.1} parent=42 // loop_body
      %v65 = vld [vmem:[%s63] sm:%s56]
      %66 = vst [vmem:[%s64] sm:%s56] %v65
    $region48: #{run.1} parent=42 // loop_footer
      %s62 = sadd.s32 1, %s58
    $region49: #{run.1} parent=42 // loop_footer_branch
      %57 = sbr.rel target = $region45
    $region50: #{run.1} parent=42 // loop_exit
      _
  $region43: #{run.1} parent=0 // pred_fallthru
    _
  // Predicated region
  $region66: #{run.1} parent=0 // pred_check
    _
  $region67: #{run.1} parent=0 // pred_check_branch
    %83 = sbr.rel (0) target = $region69
  $region68: #{run.1} parent=0 // pred_region
    %84 = vsyncadd %s50, 128
  $region69: #{run.1} parent=0 // pred_fallthru
    _
  %s85 = smul.u32 8, 1
  %s86 = sshll.u32 %s85, 4
  %87 = dma.done [#allocation2], %s86
  %s88 = sshll.u32 %s85, 4
  %89 = dma.done %s50, %s88
  %90 = vsyncmov [#allocation2]
  %s91 = vpop.sfrf %90
  %p92 = scmp.eq.s32.totalorder %s91, 0
  %p93 = pneg %p92
  %95 = shalt.err (%p93)
  %s96 = scalar_lea.sflag [#allocation2], 1
  %97 = vsyncmov %s96
  %s98 = vpop.sfrf %97
  %p99 = scmp.eq.s32.totalorder %s98, 0
  %p100 = pneg %p99
  %102 = shalt.err (%p100)

</llo_original>
